<compile_context>
chip_gen: v5e
topology: v5e:2x2
jax: 0.10.0
libtpu: 0.0.40
codegen_flags: <defaults>
</compile_context>

<pallas_src>
import functools
import math

import jax
import jax.numpy as jnp
from jax import lax
from jax.experimental import pallas as pl
from jax.experimental.pallas import tpu as pltpu

_LANE = 128
_CHUNK = 64                            # rows per fori_loop iteration
_SUM_BLOCK_BYTES = 4 * 1024 * 1024     # per-input block budget (sum/mean path)
_NONE_BLOCK_BYTES = 2 * 1024 * 1024    # per-stream block budget ('none' path)
_VMEM_LIMIT = 40 * 1024 * 1024         # headroom vs v7x 64 MiB physical VMEM


def _round_up(x, m):
    return -(-x // m) * m


def _pick_block(rows, itemsize, sub, max_bytes):
    """Choose (block_rows, chunk).

    block_rows is a multiple of the dtype sublane pack, a multiple of _CHUNK
    whenever it is >= _CHUNK, capped by a per-input byte budget, and capped
    near ceil(rows/2) so the grid has >= 2 steps (v7x megacore) when possible.
    """
    max_rows = max(_CHUNK, (max_bytes // (_LANE * itemsize)) // _CHUNK * _CHUNK)
    half = -(-rows // 2)
    if half >= _CHUNK:
        block_rows = min(max_rows, _round_up(half, _CHUNK))
        chunk = _CHUNK
    else:
        block_rows = _round_up(half, sub)
        chunk = block_rows
    return block_rows, chunk


def _mse_partial_sum_kernel(p_ref, t_ref, o_ref, *, block_rows, chunk, rows):
    """Per-grid-step partial sum of (p - t)^2 as an (8, 128) f32 tile."""
    ragged = (rows % block_rows) != 0          # static Python bool
    if ragged:
        last_valid = rows % block_rows         # static
        is_last = pl.program_id(0) == pl.num_programs(0) - 1
        valid = jnp.where(is_last, jnp.int32(last_valid), jnp.int32(block_rows))
        row_iota = lax.broadcasted_iota(jnp.int32, (chunk, _LANE), 0)

    def body(c, acc):
        r = pl.multiple_of(c * chunk, chunk)
        p = p_ref[pl.ds(r, chunk), :].astype(jnp.float32)
        t = t_ref[pl.ds(r, chunk), :].astype(jnp.float32)
        d = p - t
        if ragged:
            # Zero out rows beyond the true row count (Pallas-padded garbage
            # in the last block; also harmless for zero-padded tail rows).
            d = jnp.where((row_iota + r) < valid, d, jnp.float32(0.0))
        return acc + d * d

    acc = lax.fori_loop(0, block_rows // chunk, body,
                        jnp.zeros((chunk, _LANE), jnp.float32))
    # Fold the (chunk, 128) accumulator into the (8, 128) output tile.
    out = acc[0:8, :]
    for i in range(1, chunk // 8):
        out = out + acc[i * 8:(i + 1) * 8, :]
    o_ref[...] = out


def _mse_elementwise_kernel(p_ref, t_ref, o_ref, *, loss_weight):
    d = p_ref[...].astype(jnp.float32) - t_ref[...].astype(jnp.float32)
    sq = d * d
    if loss_weight != 1.0:
        sq = sq * jnp.float32(loss_weight)
    o_ref[...] = sq.astype(o_ref.dtype)


def mse_loss(pred, target, weight=None, loss_weight=1.0, reduction='mean'):
    """Matches basicsr MSELoss(loss_weight, reduction).forward(pred, target)."""
    if reduction not in ('none', 'mean', 'sum'):
        raise ValueError(f'Unsupported reduction mode: {reduction}. '
                         f"Supported ones are: ['none', 'mean', 'sum']")
    if weight is not None:
        # TODO(synk): element-wise `weight` path of basicsr's weighted_loss is
        # not implemented (the default call uses weight=None).
        raise NotImplementedError('weight is not supported by this kernel')
    assert pred.shape == target.shape

    orig_shape = pred.shape
    out_dtype = jnp.result_type(pred.dtype, target.dtype)
    total = math.prod(orig_shape) if orig_shape else 1

    itemsize = jnp.dtype(pred.dtype).itemsize
    sub = max(8, 32 // max(itemsize, 1))       # 8 f32 / 16 bf16 / 32 int8
    pad_unit = sub * _LANE

    p = pred.reshape(-1)
    t = target.reshape(-1)
    pad = (-total) % pad_unit
    if pad:
        # Only a sub-tile (< sub*128 element) zero pad; (0-0)^2 == 0 so it is
        # neutral for sum/mean and cropped afterwards for 'none'.
        p = jnp.pad(p, (0, pad))
        t = jnp.pad(t, (0, pad))
    rows = (total + pad) // _LANE
    p = p.reshape(rows, _LANE)
    t = t.reshape(rows, _LANE)

    max_bytes = _NONE_BLOCK_BYTES if reduction == 'none' else _SUM_BLOCK_BYTES
    block_rows, chunk = _pick_block(rows, itemsize, sub, max_bytes)
    grid = (pl.cdiv(rows, block_rows),)

    in_specs = [pl.BlockSpec((block_rows, _LANE), lambda i: (i, 0)),
                pl.BlockSpec((block_rows, _LANE), lambda i: (i, 0))]
    cparams = pltpu.CompilerParams(dimension_semantics=("parallel",),
                                   vmem_limit_bytes=_VMEM_LIMIT)

    if reduction == 'none':
        sq = pl.pallas_call(
            functools.partial(_mse_elementwise_kernel,
                              loss_weight=float(loss_weight)),
            out_shape=jax.ShapeDtypeStruct((rows, _LANE), out_dtype),
            grid_spec=pltpu.PrefetchScalarGridSpec(
                num_scalar_prefetch=0,
                grid=grid,
                in_specs=in_specs,
                out_specs=pl.BlockSpec((block_rows, _LANE), lambda i: (i, 0)),
            ),
            compiler_params=cparams,
        )(p, t)
        if pad:
            return sq.reshape(-1)[:total].reshape(orig_shape)
        return sq.reshape(orig_shape)

    partials = pl.pallas_call(
        functools.partial(_mse_partial_sum_kernel,
                          block_rows=block_rows, chunk=chunk, rows=rows),
        out_shape=jax.ShapeDtypeStruct((grid[0] * 8, _LANE), jnp.float32),
        grid_spec=pltpu.PrefetchScalarGridSpec(
            num_scalar_prefetch=0,
            grid=grid,
            in_specs=in_specs,
            out_specs=pl.BlockSpec((8, _LANE), lambda i: (i, 0)),
        ),
        compiler_params=cparams,
    )(p, t)

    s = jnp.sum(partials)            # tiny (G*8, 128) reduction, done by XLA
    if reduction == 'mean':
        s = s / jnp.float32(total)
    s = jnp.float32(loss_weight) * s
    return s.astype(out_dtype)


if __name__ == "__main__":
    key = jax.random.PRNGKey(0)
    k1, k2 = jax.random.split(key)
    pred = jax.random.uniform(k1, (2, 4, 16, 16), dtype=jnp.float32)
    target = jax.random.uniform(k2, (2, 4, 16, 16), dtype=jnp.float32)

    # default: loss_weight=1.0, reduction='mean'
    loss = mse_loss(pred, target)
    jax.block_until_ready(loss)
    ref = jnp.mean((pred - target) ** 2)
    assert jnp.allclose(loss, ref, rtol=1e-6, atol=1e-6), (loss, ref)

    # exercise the other reductions too
    loss_sum = mse_loss(pred, target, reduction='sum')
    jax.block_until_ready(loss_sum)
    ref_sum = jnp.sum((pred - target) ** 2)
    assert jnp.allclose(loss_sum, ref_sum, rtol=1e-5, atol=1e-5), (loss_sum, ref_sum)

    loss_none = mse_loss(pred, target, loss_weight=0.5, reduction='none')
    jax.block_until_ready(loss_none)
    ref_none = 0.5 * (pred - target) ** 2
    assert loss_none.shape == pred.shape
    assert jnp.allclose(loss_none, ref_none, rtol=1e-6, atol=1e-6)

    print("KERNEL_OK")
</pallas_src>

<mosaic_0001>
module attributes {stable_mosaic.version = 11 : i64} {
  func.func @_mse_partial_sum_kernel(%arg0: i32, %arg1: memref<8x128xf32, #tpu.memory_space<vmem>>, %arg2: memref<8x128xf32, #tpu.memory_space<vmem>>, %arg3: memref<8x128xf32, #tpu.memory_space<vmem>>) attributes {dimension_semantics = [#tpu.dimension_semantics<parallel>], iteration_bounds = array<i64: 2>, scalar_prefetch = 0 : i64, scratch_operands = 0 : i64, tpu.core_type = #tpu.core_type<tc>, window_params = [{transform_indices = @transform_0, window_bounds = array<i64: 8, 128>}, {transform_indices = @transform_1, window_bounds = array<i64: 8, 128>}, {transform_indices = @transform_2, window_bounds = array<i64: 8, 128>}]} {
    %cst = arith.constant 0.000000e+00 : f32
    %0 = vector.broadcast %cst : f32 to vector<8x128xf32>
    %c0_i32 = arith.constant 0 : i32
    %c8_i32 = arith.constant 8 : i32
    %1 = arith.muli %c0_i32, %c8_i32 : i32
    %2 = tpu.assume_multiple %1, 8 : i32
    %3 = arith.index_cast %2 : i32 to index
    %c0 = arith.constant 0 : index
    %4 = vector.load %arg1[%3, %c0] : memref<8x128xf32, #tpu.memory_space<vmem>>, vector<8x128xf32>
    %5 = arith.index_cast %2 : i32 to index
    %c0_0 = arith.constant 0 : index
    %6 = vector.load %arg2[%5, %c0_0] : memref<8x128xf32, #tpu.memory_space<vmem>>, vector<8x128xf32>
    %7 = arith.subf %4, %6 : vector<8x128xf32>
    %8 = arith.mulf %7, %7 : vector<8x128xf32>
    %9 = arith.addf %0, %8 : vector<8x128xf32>
    %c1_i32 = arith.constant 1 : i32
    %c0_1 = arith.constant 0 : index
    %c0_2 = arith.constant 0 : index
    %10 = vector.load %arg3[%c0_1, %c0_2] : memref<8x128xf32, #tpu.memory_space<vmem>>, vector<8x128xf32>
    tpu.vector_store %arg3[%c0_1, %c0_2], %9 {strides = array<i32>} : memref<8x128xf32, #tpu.memory_space<vmem>>, vector<8x128xf32>,
    return
  }
  func.func @transform_0(%arg0: i32) -> (i32, i32) {
    %c0_i32 = arith.constant 0 : i32
    %c0_i32_0 = arith.constant 0 : i32
    return %arg0, %c0_i32 : i32, i32
  }
  func.func @transform_1(%arg0: i32) -> (i32, i32) {
    %c0_i32 = arith.constant 0 : i32
    %c0_i32_0 = arith.constant 0 : i32
    return %arg0, %c0_i32 : i32, i32
  }
  func.func @transform_2(%arg0: i32) -> (i32, i32) {
    %c0_i32 = arith.constant 0 : i32
    %c0_i32_0 = arith.constant 0 : i32
    return %arg0, %c0_i32 : i32, i32
  }
}

</mosaic_0001>

<llo_original>
// kernel: tpu_custom_call.1
$region0: #{tpu_custom_call.1}
  #allocation0 [shape = 'u32[]', space=smem, size = 0x4, offset = 0x4, fixed_abs, tag = 'smem constant byte address 0x4 - core index']
  #allocation1 [shape = 'u32[72,128]{1,0:T(1,128)}', space=vmem, size = 0x9000, scoped, tag = 'internal scratch']
  %s0 = inlined_call_operand.hbm [shape: f32[16,128], index: 0, kind: input, shape index: {}]
  %s1 = inlined_call_operand.hbm [shape: f32[16,128], index: 1, kind: input, shape index: {}]
  %s2 = inlined_call_operand.hbm [shape: f32[16,128], index: 2, kind: output, shape index: {}]
  %s3 = sld [smem:[#allocation0]]
  $region49: #{tpu_custom_call.1} parent=0
    _
  %s5 = ssub.s32 1, %s3
  %s6 = scalar_select 0, %s5, %s3
  $region1: #{tpu_custom_call.1} parent=0
    #allocation2 [shape = 'u8[8192]{0}', space=vmem, size = 0x2000, scoped, tag = 'input window, operand 0']
    #allocation3 [shape = 's32[2]{0}', space=sflag, size = 0x8, scoped, tag = 'scoped memory for tpu_custom_call.1']
    #allocation4 [shape = 's32[2]{0}', space=sflag, size = 0x8, scoped, tag = 'scoped memory for tpu_custom_call.1']
    #allocation5 [shape = 'u8[8192]{0}', space=vmem, size = 0x2000, scoped, tag = 'input window, operand 1']
    #allocation6 [shape = 's32[2]{0}', space=sflag, size = 0x8, scoped, tag = 'scoped memory for tpu_custom_call.1']
    #allocation7 [shape = 'u8[8192]{0}', space=vmem, size = 0x2000, scoped, tag = 'output window, operand 0']
    %7 = vsyncpa [#allocation3], 0
    %s8 = scalar_lea.sflag [#allocation3], 1
    %9 = vsyncpa %s8, 0
    %10 = vsyncpa [#allocation6], 0
    %s11 = scalar_lea.sflag [#allocation6], 1
    %12 = vsyncpa %s11, 0
    %13 = vsyncpa [#allocation4], 0
    %s14 = scalar_lea.sflag [#allocation4], 1
    %15 = vsyncpa %s14, 0
    loop: start=0, step=1, limit=4
    $region2: #{tpu_custom_call.1} parent=1 // loop_pre_header
      _
    $region3: #{tpu_custom_call.1} parent=1 // loop_header
      %s17 = sphi 0, %s21
      %p18 = scmp.ge.s32.totalorder %s17, 4
      %s27 = sphi 0, %s29
      %s30 = sphi 0, %s27
      %s31 = sphi 0, %s30
      %s47 = sphi 0, %s31
      %s53 = sphi 0, %s55
      %s56 = sphi 0, %s53
      %s57 = sphi 0, %s56
      %s73 = sphi 0, %s57
      %s79 = sphi 0, %s81
      %s82 = sphi 0, %s79
      %s83 = sphi 0, %s82
      %s99 = sphi 0, %s83
    $region4: #{tpu_custom_call.1} parent=1 // loop_header_branch
      %20 = sbr.rel (%p18) target = $region8
    $region5: #{tpu_custom_call.1} parent=1 // loop_body
      %s22 = ssub.s32 %s17, 1
      %s23 = ssub.s32 %s17, 2
      %s24 = sadd.s32 %s17, 1
      %s25 = ssub.s32 %s17, %s24
      %p26 = scmp.eq.s32.totalorder %s25, 0
      %s28 = sadd.s32 %s27, 1
      %s29 = scalar_select %p26, %s27, %s28
      %p32 = pneg %p26
      %p33 = scmp.eq.s32.totalorder %s17, 1
      %p34 = por %p32, %p33
      %p35 = scmp.ne.s32.totalorder %s27, %s30
      %p36 = scmp.eq.s32.totalorder %s17, 0
      %p37 = por %p35, %p36
      %p38 = scmp.ne.s32.totalorder %s27, %s30
      %p39 = scmp.eq.s32.totalorder %s22, 1
      %p40 = por %p38, %p39
      %p41 = scmp.ne.s32.totalorder %s30, %s31
      %p42 = scmp.eq.s32.totalorder %s22, 0
      %p43 = por %p41, %p42
      %p44 = scmp.ne.s32.totalorder %s30, %s31
      %p45 = scmp.eq.s32.totalorder %s23, 1
      %p46 = por %p44, %p45
      %p48 = scmp.ne.s32.totalorder %s31, %s47
      %p49 = scmp.eq.s32.totalorder %s23, 0
      %p50 = por %p48, %p49
      %s51 = ssub.s32 %s17, %s24
      %p52 = scmp.eq.s32.totalorder %s51, 0
      %s54 = sadd.s32 %s53, 1
      %s55 = scalar_select %p52, %s53, %s54
      %p58 = pneg %p52
      %p59 = scmp.eq.s32.totalorder %s17, 1
      %p60 = por %p58, %p59
      %p61 = scmp.ne.s32.totalorder %s53, %s56
      %p62 = scmp.eq.s32.totalorder %s17, 0
      %p63 = por %p61, %p62
      %p64 = scmp.ne.s32.totalorder %s53, %s56
      %p65 = scmp.eq.s32.totalorder %s22, 1
      %p66 = por %p64, %p65
      %p67 = scmp.ne.s32.totalorder %s56, %s57
      %p68 = scmp.eq.s32.totalorder %s22, 0
      %p69 = por %p67, %p68
      %p70 = scmp.ne.s32.totalorder %s56, %s57
      %p71 = scmp.eq.s32.totalorder %s23, 1
      %p72 = por %p70, %p71
      %p74 = scmp.ne.s32.totalorder %s57, %s73
      %p75 = scmp.eq.s32.totalorder %s23, 0
      %p76 = por %p74, %p75
      %s77 = ssub.s32 %s17, %s24
      %p78 = scmp.eq.s32.totalorder %s77, 0
      %s80 = sadd.s32 %s79, 1
      %s81 = scalar_select %p78, %s79, %s80
      %p84 = pneg %p78
      %p85 = scmp.eq.s32.totalorder %s17, 1
      %p86 = por %p84, %p85
      %p87 = scmp.ne.s32.totalorder %s79, %s82
      %p88 = scmp.eq.s32.totalorder %s17, 0
      %p89 = por %p87, %p88
      %p90 = scmp.ne.s32.totalorder %s79, %s82
      %p91 = scmp.eq.s32.totalorder %s22, 1
      %p92 = por %p90, %p91
      %p93 = scmp.ne.s32.totalorder %s82, %s83
      %p94 = scmp.eq.s32.totalorder %s22, 0
      %p95 = por %p93, %p94
      %p96 = scmp.ne.s32.totalorder %s82, %s83
      %p97 = scmp.eq.s32.totalorder %s23, 1
      %p98 = por %p96, %p97
      %p100 = scmp.ne.s32.totalorder %s83, %s99
      %p101 = scmp.eq.s32.totalorder %s23, 0
      %p102 = por %p100, %p101
      %p103 = scmp.le.s32.totalorder 1, %s17
      %p104 = scmp.lt.s32.totalorder %s17, 3
      %p105 = pnand %p103, %p104
      %p106 = pneg %p105
      // Predicated region
      $region9: #{tpu_custom_call.1} parent=5 // pred_check
        _
      $region10: #{tpu_custom_call.1} parent=5 // pred_check_branch
        %108 = sbr.rel (%p105) target = $region12
      $region11: #{tpu_custom_call.1} parent=5 // pred_region
        %s109 = ssub.s32 %s17, 1
      $region12: #{tpu_custom_call.1} parent=5 // pred_fallthru
        _
      %p110 = scmp.lt.s32.totalorder %s17, 2
      // Predicated region
      $region13: #{tpu_custom_call.1} parent=5 // pred_check
        %p111 = pneg %p110
      $region14: #{tpu_custom_call.1} parent=5 // pred_check_branch
        %113 = sbr.rel (%p111) target = $region16
      $region15: #{tpu_custom_call.1} parent=5 // pred_region
        // Predicated region
        $region17: #{tpu_custom_call.1} parent=15 // pred_check
          %p114 = pneg %p37
        $region18: #{tpu_custom_call.1} parent=15 // pred_check_branch
          %116 = sbr.rel (%p114) target = $region20
        $region19: #{tpu_custom_call.1} parent=15 // pred_region
          %s117 = sand.u32 %s27, 1
          %s118 = scalar_lea.sflag [#allocation3], %s117
          %s119 = sand.u32 %s27, 1
          %s120 = smul.addr %s119, 8
          %s121 = scalar_lea.vmem [#allocation2], %s120
          %123 = vsyncadd %s118, 0
          %s124 = smul.addr %s17, 8
          %s125 = scalar_lea.hbm %s0, %s124
          %s127 = sshll.u32 %s125, 4
          %s128 = int_to_ptr.hbm [resolvable:$true] %s127
          %s129 = sshll.u32 %s121, 4
          %s130 = int_to_ptr.vmem [resolvable:$true] %s129
          %132 = dma.hbm_to_vmem [thread:$0]  %s128, 128, %s130, %s118
        $region20: #{tpu_custom_call.1} parent=15 // pred_fallthru
          _
        // Predicated region
        $region21: #{tpu_custom_call.1} parent=15 // pred_check
          %p133 = pneg %p63
        $region22: #{tpu_custom_call.1} parent=15 // pred_check_branch
          %135 = sbr.rel (%p133) target = $region24
        $region23: #{tpu_custom_call.1} parent=15 // pred_region
          %s136 = sand.u32 %s53, 1
          %s137 = scalar_lea.sflag [#allocation6], %s136
          %s138 = sand.u32 %s53, 1
          %s139 = smul.addr %s138, 8
          %s140 = scalar_lea.vmem [#allocation5], %s139
          %142 = vsyncadd %s137, 0
          %s143 = smul.addr %s17, 8
          %s144 = scalar_lea.hbm %s1, %s143
          %s146 = sshll.u32 %s144, 4
          %s147 = int_to_ptr.hbm [resolvable:$true] %s146
          %s148 = sshll.u32 %s140, 4
          %s149 = int_to_ptr.vmem [resolvable:$true] %s148
          %151 = dma.hbm_to_vmem [thread:$0]  %s147, 128, %s149, %s137
        $region24: #{tpu_custom_call.1} parent=15 // pred_fallthru
          _
      $region16: #{tpu_custom_call.1} parent=5 // pred_fallthru
        _
      %p152 = scmp.le.s32.totalorder 1, %s17
      %p153 = scmp.lt.s32.totalorder %s17, 3
      %p154 = pnand %p152, %p153
      %p155 = pneg %p154
      // Predicated region
      $region25: #{tpu_custom_call.1} parent=5 // pred_check
        _
      $region26: #{tpu_custom_call.1} parent=5 // pred_check_branch
        %157 = sbr.rel (%p154) target = $region28
      $region27: #{tpu_custom_call.1} parent=5 // pred_region
        %s158 = ssub.s32 %s17, 1
        %s159 = sand.u32 %s30, 1
        %s160 = scalar_lea.sflag [#allocation3], %s159
        %s161 = sand.u32 %s30, 1
        %s162 = smul.addr %s161, 8
        %s163 = scalar_lea.vmem [#allocation2], %s162
        // Predicated region
        $region29: #{tpu_custom_call.1} parent=27 // pred_check
          %p164 = pneg %p43
        $region30: #{tpu_custom_call.1} parent=27 // pred_check_branch
          %166 = sbr.rel (%p164) target = $region32
        $region31: #{tpu_custom_call.1} parent=27 // pred_region
          %168 = dma.done %s160, 128
        $region32: #{tpu_custom_call.1} parent=27 // pred_fallthru
          _
        %s169 = sand.u32 %s56, 1
        %s170 = scalar_lea.sflag [#allocation6], %s169
        %s171 = sand.u32 %s56, 1
        %s172 = smul.addr %s171, 8
        %s173 = scalar_lea.vmem [#allocation5], %s172
        // Predicated region
        $region33: #{tpu_custom_call.1} parent=27 // pred_check
          %p174 = pneg %p69
        $region34: #{tpu_custom_call.1} parent=27 // pred_check_branch
          %176 = sbr.rel (%p174) target = $region36
        $region35: #{tpu_custom_call.1} parent=27 // pred_region
          %178 = dma.done %s170, 128
        $region36: #{tpu_custom_call.1} parent=27 // pred_fallthru
          _
        %s179 = sand.u32 %s30, 1
        %s180 = scalar_lea.sflag [#allocation3], %s179
        %s181 = sand.u32 %s30, 1
        %s182 = smul.addr %s181, 8
        %s183 = scalar_lea.vmem [#allocation2], %s182
        %p184 = pneg %p43
        %p185 = pneg %p40
        %s186 = sand.u32 %s56, 1
        %s187 = scalar_lea.sflag [#allocation6], %s186
        %s188 = sand.u32 %s56, 1
        %s189 = smul.addr %s188, 8
        %s190 = scalar_lea.vmem [#allocation5], %s189
        %p191 = pneg %p69
        %p192 = pneg %p66
        %p193 = pneg %p95
        %p194 = pneg %p92
        %s195 = sand.u32 %s82, 1
        %s196 = scalar_lea.sflag [#allocation4], %s195
        %s197 = sand.u32 %s82, 1
        %s198 = smul.addr %s197, 8
        %s199 = scalar_lea.vmem [#allocation7], %s198
        %v200 = vld [vmem:[%s163] sm:$0xff]
        %v201 = vld [vmem:[%s173] sm:$0xff]
        %v202 = vsub.f32 %v200, %v201
        %v203 = vmul.f32 %v202, %v202
        %v204 = vadd.f32 %v203, 0.0
        %205 = vst [vmem:[%s199] sm:$0xff] %v204
        %s206 = sand.u32 %s82, 1
        %s207 = scalar_lea.sflag [#allocation4], %s206
        %s208 = sand.u32 %s82, 1
        %s209 = smul.addr %s208, 8
        %s210 = scalar_lea.vmem [#allocation7], %s209
        // Predicated region
        $region37: #{tpu_custom_call.1} parent=27 // pred_check
          %p211 = pneg %p92
        $region38: #{tpu_custom_call.1} parent=27 // pred_check_branch
          %213 = sbr.rel (%p211) target = $region40
        $region39: #{tpu_custom_call.1} parent=27 // pred_region
          %215 = vsyncadd %s207, 0
          %s216 = smul.addr %s22, 8
          %s217 = scalar_lea.hbm %s2, %s216
          %s219 = sshll.u32 %s210, 4
          %s220 = int_to_ptr.vmem [resolvable:$true] %s219
          %s221 = sshll.u32 %s217, 4
          %s222 = int_to_ptr.hbm [resolvable:$true] %s221
          %224 = dma.vmem_to_hbm [thread:$0]  %s220, 128, %s222, %s207
        $region40: #{tpu_custom_call.1} parent=27 // pred_fallthru
          _
      $region28: #{tpu_custom_call.1} parent=5 // pred_fallthru
        _
      %p225 = scmp.le.s32.totalorder 2, %s17
      // Predicated region
      $region41: #{tpu_custom_call.1} parent=5 // pred_check
        %p226 = pneg %p225
      $region42: #{tpu_custom_call.1} parent=5 // pred_check_branch
        %228 = sbr.rel (%p226) target = $region44
      $region43: #{tpu_custom_call.1} parent=5 // pred_region
        %s229 = ssub.s32 %s17, 2
        // Predicated region
        $region45: #{tpu_custom_call.1} parent=43 // pred_check
          %p230 = pneg %p98
        $region46: #{tpu_custom_call.1} parent=43 // pred_check_branch
          %232 = sbr.rel (%p230) target = $region48
        $region47: #{tpu_custom_call.1} parent=43 // pred_region
          %s233 = sand.u32 %s83, 1
          %s234 = scalar_lea.sflag [#allocation4], %s233
          %s235 = sand.u32 %s83, 1
          %s236 = smul.addr %s235, 8
          %s237 = scalar_lea.vmem [#allocation7], %s236
          %239 = dma.done %s234, 128
        $region48: #{tpu_custom_call.1} parent=43 // pred_fallthru
          _
      $region44: #{tpu_custom_call.1} parent=5 // pred_fallthru
        _
    $region6: #{tpu_custom_call.1} parent=1 // loop_footer
      %s21 = sadd.s32 1, %s17
    $region7: #{tpu_custom_call.1} parent=1 // loop_footer_branch
      %16 = sbr.rel target = $region3
    $region8: #{tpu_custom_call.1} parent=1 // loop_exit
      _
    %240 = vsyncpa [#allocation3], 1
    %s241 = scalar_lea.sflag [#allocation3], 1
    %242 = vsyncpa %s241, 1
    %243 = vsyncpa [#allocation6], 1
    %s244 = scalar_lea.sflag [#allocation6], 1
    %245 = vsyncpa %s244, 1
    %246 = vsyncpa [#allocation4], 1
    %s247 = scalar_lea.sflag [#allocation4], 1
    %248 = vsyncpa %s247, 1

</llo_original>
